<compile_context>
chip_gen: v6e
topology: v6e:2x2x1
jax: 0.10.0
libtpu: 0.0.40
codegen_flags: <defaults>
</compile_context>

<pallas_src>
import functools
import math

import jax
import jax.numpy as jnp
from jax.experimental import pallas as pl
from jax.experimental.pallas import tpu as pltpu


def _leaky_relu(x, slope=0.2):
    return jnp.where(x >= 0, x, slope * x)


def _linear_generator_kernel(
    x_ref,                 # (B, Lp)   bf16, resident
    w1_ref, b1_ref,        # (Lp, H1)  bf16 / (1, H1) f32, resident
    w2_ref,                # (H1, H2)  bf16, resident (b2 dropped: cancels under BN)
    bn_ref,                # (2, H2)   f32, resident: row0 = gamma, row1 = beta
    w3_ref, b3_ref,        # (H2, TN)  bf16 / (1, TN) f32, tiled over the grid
    out_ref,               # (B, TN)   f32, tiled over the grid
    *,
    eps,
):
    # ---- prologue: Linear1 + LeakyReLU, Linear2 + BN + LeakyReLU -----------
    # Recomputed per output tile: tiny vs. the final matmul at small B, and it
    # keeps the grid axis state-free so it can be marked "parallel" (v7x
    # megacore). BN stats are over the full, resident batch, so they stay exact
    # regardless of N tiling.
    h1 = jnp.dot(x_ref[...], w1_ref[...], preferred_element_type=jnp.float32)
    h1 = _leaky_relu(h1 + b1_ref[...])

    # Linear2 without bias: under training-mode BatchNorm the bias is removed
    # exactly by the mean subtraction below (zero numerical change).
    h2 = jnp.dot(h1.astype(jnp.bfloat16), w2_ref[...],
                 preferred_element_type=jnp.float32)

    # BatchNorm1d(H2, eps=0.8), training mode, centered (two-pass) variance.
    inv_b = 1.0 / h2.shape[0]
    mean = jnp.sum(h2, axis=0, keepdims=True) * inv_b
    c = h2 - mean
    var = jnp.sum(c * c, axis=0, keepdims=True) * inv_b
    gamma = bn_ref[0:1, :]
    beta = bn_ref[1:2, :]
    h2n = _leaky_relu(c * (gamma * jax.lax.rsqrt(var + eps)) + beta)

    # ---- tiled final layer: (B, H2) @ (H2, TN) + bias, then Tanh ------------
    h3 = jnp.dot(h2n.astype(jnp.bfloat16), w3_ref[...],
                 preferred_element_type=jnp.float32) + b3_ref[...]
    out_ref[...] = jnp.tanh(h3)


def _round_up(n, m):
    return ((n + m - 1) // m) * m


def _pad_axis(a, axis, new_size):
    pad = new_size - a.shape[axis]
    if pad == 0:
        return a
    widths = [(0, 0)] * a.ndim
    widths[axis] = (0, pad)
    return jnp.pad(a, widths)


def _choose_tile_n(output_dim, max_tile_n=2048, min_tiles=4):
    """Pick the N tile for the final layer.

    Aims for >= min_tiles tiles (2 per v7x TensorCore) once the output is wide
    enough, growing toward max_tile_n (1-2 MB bf16 per w3 tile) for large
    output_dim so the HBM-bound w3 stream amortizes per-grid-step overhead.
    Always a multiple of 128 (lane-dense stores).
    """
    n128 = _round_up(output_dim, 128)
    per_tile = max(128, (n128 // min_tiles) // 128 * 128)
    tn = min(max_tile_n, per_tile, n128)
    n_p = _round_up(n128, tn)
    return tn, n_p


def prepare_params(params, *, max_tile_n=2048, min_tiles=4):
    """One-time weight preprocessing (hoisted out of the per-call forward).

    Casts matmul weights to bf16, zero-pads w1's K (latent) and w3/b3's N to
    128-lane multiples, packs gamma/beta into a single (2, H2) slab, and drops
    b2 (cancels exactly under training-mode BatchNorm). Only x is cast/padded
    per forward call.
    """
    latent_dim = params["w1"].shape[0]
    h1_dim = params["w1"].shape[1]
    h2_dim = params["w2"].shape[1]
    output_dim = params["w3"].shape[1]

    lat_p = _round_up(latent_dim, 128)
    tn, n_p = _choose_tile_n(output_dim, max_tile_n, min_tiles)

    prepared = {
        "w1": _pad_axis(params["w1"].astype(jnp.bfloat16), 0, lat_p),
        "b1": params["b1"].astype(jnp.float32),
        "w2": params["w2"].astype(jnp.bfloat16),
        # row 0 = gamma, row 1 = beta
        "bn": jnp.concatenate([params["gamma"], params["beta"]], axis=0
                              ).astype(jnp.float32),
        "w3": _pad_axis(params["w3"].astype(jnp.bfloat16), 1, n_p),
        "b3": _pad_axis(params["b3"].astype(jnp.float32), 1, n_p),
        # static metadata
        "latent_dim": latent_dim, "lat_p": lat_p,
        "h1_dim": h1_dim, "h2_dim": h2_dim,
        "output_dim": output_dim, "tn": tn, "n_p": n_p,
    }
    # Force materialization once, outside the per-call path.
    jax.block_until_ready([prepared["w1"], prepared["w2"], prepared["w3"],
                           prepared["b1"], prepared["b3"], prepared["bn"]])
    return prepared


def linear_generator_forward(x, prepared, channels_dim, side_length):
    B = x.shape[0]
    lat_p = prepared["lat_p"]
    h1_dim = prepared["h1_dim"]
    h2_dim = prepared["h2_dim"]
    output_dim = prepared["output_dim"]
    tn, n_p = prepared["tn"], prepared["n_p"]
    eps = 0.8   # nn.BatchNorm1d(hidden_dim, 0.8): second positional arg is eps.

    # Only x is cast/padded per call (zero padding of the first matmul's K in
    # both x and w1 leaves the math unchanged).
    xp = _pad_axis(x.astype(jnp.bfloat16), 1, lat_p)

    num_tiles = n_p // tn
    # The w3 stream dominates HBM traffic; with many tiles a third buffer keeps
    # the weight DMA back-to-back (negligible VMEM cost).
    w3_spec_kwargs = dict(pipeline_mode=pl.Buffered(3)) if num_tiles > 2 else {}

    def resident(shape):
        # Constant index_map -> block never changes -> stays VMEM-resident
        # (no per-tile re-DMA of the small weights / params / activations).
        return pl.BlockSpec(shape, lambda j: (0, 0))

    flat = pl.pallas_call(
        functools.partial(_linear_generator_kernel, eps=eps),
        out_shape=jax.ShapeDtypeStruct((B, n_p), jnp.float32),
        grid=(num_tiles,),
        in_specs=[
            resident((B, lat_p)),                                           # x
            resident((lat_p, h1_dim)),                                      # w1
            resident((1, h1_dim)),                                          # b1
            resident((h1_dim, h2_dim)),                                     # w2
            resident((2, h2_dim)),                                          # gamma/beta
            pl.BlockSpec((h2_dim, tn), lambda j: (0, j), **w3_spec_kwargs), # w3 tile
            pl.BlockSpec((1, tn), lambda j: (0, j), **w3_spec_kwargs),      # b3 tile
        ],
        out_specs=pl.BlockSpec((B, tn), lambda j: (0, j)),
        compiler_params=pltpu.CompilerParams(
            dimension_semantics=("parallel",),   # >=2 tiles -> both v7x TCs busy
        ),
    )(
        xp,
        prepared["w1"], prepared["b1"],
        prepared["w2"],
        prepared["bn"],
        prepared["w3"], prepared["b3"],
    )

    # matches .view(-1, channels_dim, side, side); padded columns are tanh(0)=0.
    return flat[:, :output_dim].reshape(-1, channels_dim, side_length, side_length)


def init_params(key, latent_dim, output_dim, hidden_dim=128, num_layers=3):
    """Deterministic init mimicking nn.Linear default (uniform +-1/sqrt(fan_in)).

    Weights are returned already transposed to (in, out), in f32; prepare_params
    casts matmul operands to bf16. Only the num_layers=3 configuration used by
    the reference module is supported (BN on the second Linear).
    """
    assert num_layers == 3
    h1 = hidden_dim                      # 128
    h2 = min(hidden_dim * 2, 1024)       # 256

    ks = jax.random.split(key, 6)

    def lin(kw, kb, fan_in, fan_out):
        bound = 1.0 / math.sqrt(fan_in)
        w = jax.random.uniform(kw, (fan_in, fan_out), jnp.float32, -bound, bound)
        b = jax.random.uniform(kb, (1, fan_out), jnp.float32, -bound, bound)
        return w, b

    w1, b1 = lin(ks[0], ks[1], latent_dim, h1)
    w2, b2 = lin(ks[2], ks[3], h1, h2)
    w3, b3 = lin(ks[4], ks[5], h2, output_dim)

    return {
        "w1": w1, "b1": b1,
        "w2": w2, "b2": b2,                        # b2 kept for fidelity; dropped by prepare_params
        "gamma": jnp.ones((1, h2), jnp.float32),   # BN weight init = 1
        "beta": jnp.zeros((1, h2), jnp.float32),   # BN bias init = 0
        "w3": w3, "b3": b3,
    }


def _reference_forward(x, params, channels_dim, side_length, eps=0.8):
    """Pure-JAX f32 reference matching the PyTorch module (training-mode BN)."""
    h1 = _leaky_relu(x @ params["w1"] + params["b1"])
    h2 = h1 @ params["w2"] + params["b2"]
    mean = jnp.mean(h2, axis=0, keepdims=True)
    var = jnp.mean((h2 - mean) ** 2, axis=0, keepdims=True)
    h2 = (h2 - mean) * (params["gamma"] * jax.lax.rsqrt(var + eps)) + params["beta"]
    h2 = _leaky_relu(h2)
    h3 = jnp.tanh(h2 @ params["w3"] + params["b3"])
    return h3.reshape(-1, channels_dim, side_length, side_length)


if __name__ == "__main__":
    # Small shapes consistent with the module:
    #   latent_dim=32, output_dim=256 -> side_length=16, channels_dim=1, batch=8
    latent_dim = 32
    output_dim = 256
    channels_dim = 1
    side_length = int(math.sqrt(output_dim))
    batch = 8

    key = jax.random.PRNGKey(0)
    k_params, k_x = jax.random.split(key)

    params = init_params(k_params, latent_dim, output_dim)
    prepared = prepare_params(params)          # one-time weight cast/pad/pack
    x = jax.random.normal(k_x, (batch, latent_dim), jnp.float32)

    out = linear_generator_forward(x, prepared, channels_dim, side_length)
    out = jax.block_until_ready(out)

    assert out.shape == (batch, channels_dim, side_length, side_length), out.shape
    assert bool(jnp.all(jnp.isfinite(out)))
    assert bool(jnp.all(jnp.abs(out) <= 1.0))  # tanh range

    # Loose-tolerance check vs. f32 reference (bf16 matmul paths ~1e-2 level).
    ref = _reference_forward(x, params, channels_dim, side_length)
    max_err = float(jnp.max(jnp.abs(out - ref)))
    assert max_err < 5e-2, f"max abs error vs f32 reference: {max_err}"

    print("KERNEL_OK")
</pallas_src>

<mosaic_0001>
module attributes {stable_mosaic.version = 11 : i64} {
  func.func @_linear_generator_kernel(%arg0: i32, %arg1: memref<8x128xbf16, #tpu.memory_space<vmem>>, %arg2: memref<128x128xbf16, #tpu.memory_space<vmem>>, %arg3: memref<1x128xf32, #tpu.memory_space<vmem>>, %arg4: memref<128x256xbf16, #tpu.memory_space<vmem>>, %arg5: memref<2x256xf32, #tpu.memory_space<vmem>>, %arg6: memref<256x128xbf16, #tpu.memory_space<vmem>>, %arg7: memref<1x128xf32, #tpu.memory_space<vmem>>, %arg8: memref<8x128xf32, #tpu.memory_space<vmem>>) attributes {dimension_semantics = [#tpu.dimension_semantics<parallel>], iteration_bounds = array<i64: 2>, scalar_prefetch = 0 : i64, scratch_operands = 0 : i64, tpu.core_type = #tpu.core_type<tc>, window_params = [{pipeline_mode = #tpu.pipeline_mode<synchronous>, transform_indices = @transform_0, window_bounds = array<i64: 8, 128>}, {pipeline_mode = #tpu.pipeline_mode<synchronous>, transform_indices = @transform_1, window_bounds = array<i64: 128, 128>}, {pipeline_mode = #tpu.pipeline_mode<synchronous>, transform_indices = @transform_2, window_bounds = array<i64: 1, 128>}, {pipeline_mode = #tpu.pipeline_mode<synchronous>, transform_indices = @transform_3, window_bounds = array<i64: 128, 256>}, {pipeline_mode = #tpu.pipeline_mode<synchronous>, transform_indices = @transform_4, window_bounds = array<i64: 2, 256>}, {transform_indices = @transform_5, window_bounds = array<i64: 256, 128>}, {transform_indices = @transform_6, window_bounds = array<i64: 1, 128>}, {transform_indices = @transform_7, window_bounds = array<i64: 8, 128>}]} {
    %c0 = arith.constant 0 : index
    %c0_0 = arith.constant 0 : index
    %0 = vector.load %arg1[%c0, %c0_0] : memref<8x128xbf16, #tpu.memory_space<vmem>>, vector<8x128xbf16>
    %c0_1 = arith.constant 0 : index
    %c0_2 = arith.constant 0 : index
    %1 = vector.load %arg2[%c0_1, %c0_2] : memref<128x128xbf16, #tpu.memory_space<vmem>>, vector<128x128xbf16>
    %cst = arith.constant dense<0.000000e+00> : vector<8x128xf32>
    %2 = tpu.matmul %0, %1, %cst {dimension_numbers = #tpu.dot_dimension_numbers<[1], [0], [0], [1], [0, 0, 1, 1], [], []>} : vector<8x128xbf16>, vector<128x128xbf16>, vector<8x128xf32> -> vector<8x128xf32>
    %c0_3 = arith.constant 0 : index
    %c0_4 = arith.constant 0 : index
    %3 = vector.load %arg3[%c0_3, %c0_4] : memref<1x128xf32, #tpu.memory_space<vmem>>, vector<1x128xf32>
    %4 = vector.broadcast %3 : vector<1x128xf32> to vector<8x128xf32>
    %5 = arith.addf %2, %4 : vector<8x128xf32>
    %cst_5 = arith.constant 0.000000e+00 : f32
    %6 = vector.broadcast %cst_5 : f32 to vector<8x128xf32>
    %7 = arith.cmpf oge, %5, %6 : vector<8x128xf32>
    %cst_6 = arith.constant 2.000000e-01 : f32
    %8 = vector.broadcast %cst_6 : f32 to vector<8x128xf32>
    %9 = arith.mulf %8, %5 : vector<8x128xf32>
    %10 = arith.select %7, %5, %9 : vector<8x128xi1>, vector<8x128xf32>
    %11 = arith.truncf %10 : vector<8x128xf32> to vector<8x128xbf16>
    %c0_7 = arith.constant 0 : index
    %c0_8 = arith.constant 0 : index
    %12 = vector.load %arg4[%c0_7, %c0_8] : memref<128x256xbf16, #tpu.memory_space<vmem>>, vector<128x256xbf16>
    %cst_9 = arith.constant dense<0.000000e+00> : vector<8x256xf32>
    %13 = tpu.matmul %11, %12, %cst_9 {dimension_numbers = #tpu.dot_dimension_numbers<[1], [0], [0], [1], [0, 0, 1, 1], [], []>} : vector<8x128xbf16>, vector<128x256xbf16>, vector<8x256xf32> -> vector<8x256xf32>
    %cst_10 = arith.constant dense<0.000000e+00> : vector<256xf32>
    %14 = vector.multi_reduction <add>, %13, %cst_10 [0] : vector<8x256xf32> to vector<256xf32>
    %15 = vector.shape_cast %14 : vector<256xf32> to vector<1x256xf32>
    %cst_11 = arith.constant 1.250000e-01 : f32
    %16 = vector.broadcast %cst_11 : f32 to vector<1x256xf32>
    %17 = arith.mulf %15, %16 : vector<1x256xf32>
    %18 = vector.broadcast %17 : vector<1x256xf32> to vector<8x256xf32>
    %19 = arith.subf %13, %18 : vector<8x256xf32>
    %20 = arith.mulf %19, %19 : vector<8x256xf32>
    %cst_12 = arith.constant dense<0.000000e+00> : vector<256xf32>
    %21 = vector.multi_reduction <add>, %20, %cst_12 [0] : vector<8x256xf32> to vector<256xf32>
    %22 = vector.shape_cast %21 : vector<256xf32> to vector<1x256xf32>
    %cst_13 = arith.constant 1.250000e-01 : f32
    %23 = vector.broadcast %cst_13 : f32 to vector<1x256xf32>
    %24 = arith.mulf %22, %23 : vector<1x256xf32>
    %c0_14 = arith.constant 0 : index
    %c0_15 = arith.constant 0 : index
    %25 = vector.load %arg5[%c0_14, %c0_15] : memref<2x256xf32, #tpu.memory_space<vmem>>, vector<1x256xf32>
    %c1 = arith.constant 1 : index
    %c0_16 = arith.constant 0 : index
    %26 = vector.load %arg5[%c1, %c0_16] : memref<2x256xf32, #tpu.memory_space<vmem>>, vector<1x256xf32>
    %cst_17 = arith.constant 8.000000e-01 : f32
    %27 = vector.broadcast %cst_17 : f32 to vector<1x256xf32>
    %28 = arith.addf %24, %27 : vector<1x256xf32>
    %29 = math.rsqrt %28 : vector<1x256xf32>
    %30 = arith.mulf %25, %29 : vector<1x256xf32>
    %31 = vector.broadcast %30 : vector<1x256xf32> to vector<8x256xf32>
    %32 = arith.mulf %19, %31 : vector<8x256xf32>
    %33 = vector.broadcast %26 : vector<1x256xf32> to vector<8x256xf32>
    %34 = arith.addf %32, %33 : vector<8x256xf32>
    %cst_18 = arith.constant 0.000000e+00 : f32
    %35 = vector.broadcast %cst_18 : f32 to vector<8x256xf32>
    %36 = arith.cmpf oge, %34, %35 : vector<8x256xf32>
    %cst_19 = arith.constant 2.000000e-01 : f32
    %37 = vector.broadcast %cst_19 : f32 to vector<8x256xf32>
    %38 = arith.mulf %37, %34 : vector<8x256xf32>
    %39 = arith.select %36, %34, %38 : vector<8x256xi1>, vector<8x256xf32>
    %40 = arith.truncf %39 : vector<8x256xf32> to vector<8x256xbf16>
    %c0_20 = arith.constant 0 : index
    %c0_21 = arith.constant 0 : index
    %41 = vector.load %arg6[%c0_20, %c0_21] : memref<256x128xbf16, #tpu.memory_space<vmem>>, vector<256x128xbf16>
    %cst_22 = arith.constant dense<0.000000e+00> : vector<8x128xf32>
    %42 = tpu.matmul %40, %41, %cst_22 {dimension_numbers = #tpu.dot_dimension_numbers<[1], [0], [0], [1], [0, 0, 1, 1], [], []>} : vector<8x256xbf16>, vector<256x128xbf16>, vector<8x128xf32> -> vector<8x128xf32>
    %c0_23 = arith.constant 0 : index
    %c0_24 = arith.constant 0 : index
    %43 = vector.load %arg7[%c0_23, %c0_24] : memref<1x128xf32, #tpu.memory_space<vmem>>, vector<1x128xf32>
    %44 = vector.broadcast %43 : vector<1x128xf32> to vector<8x128xf32>
    %45 = arith.addf %42, %44 : vector<8x128xf32>
    %46 = math.tanh %45 : vector<8x128xf32>
    %c0_25 = arith.constant 0 : index
    %c0_26 = arith.constant 0 : index
    %47 = vector.load %arg8[%c0_25, %c0_26] : memref<8x128xf32, #tpu.memory_space<vmem>>, vector<8x128xf32>
    tpu.vector_store %arg8[%c0_25, %c0_26], %46 {strides = array<i32>} : memref<8x128xf32, #tpu.memory_space<vmem>>, vector<8x128xf32>,
    return
  }
  func.func @transform_0(%arg0: i32) -> (i32, i32) {
    %c0_i32 = arith.constant 0 : i32
    %c0_i32_0 = arith.constant 0 : i32
    %c0_i32_1 = arith.constant 0 : i32
    return %c0_i32, %c0_i32_0 : i32, i32
  }
  func.func @transform_1(%arg0: i32) -> (i32, i32) {
    %c0_i32 = arith.constant 0 : i32
    %c0_i32_0 = arith.constant 0 : i32
    %c0_i32_1 = arith.constant 0 : i32
    return %c0_i32, %c0_i32_0 : i32, i32
  }
  func.func @transform_2(%arg0: i32) -> (i32, i32) {
    %c0_i32 = arith.constant 0 : i32
    %c0_i32_0 = arith.constant 0 : i32
    %c0_i32_1 = arith.constant 0 : i32
    return %c0_i32, %c0_i32_0 : i32, i32
  }
  func.func @transform_3(%arg0: i32) -> (i32, i32) {
    %c0_i32 = arith.constant 0 : i32
    %c0_i32_0 = arith.constant 0 : i32
    %c0_i32_1 = arith.constant 0 : i32
    return %c0_i32, %c0_i32_0 : i32, i32
  }
  func.func @transform_4(%arg0: i32) -> (i32, i32) {
    %c0_i32 = arith.constant 0 : i32
    %c0_i32_0 = arith.constant 0 : i32
    %c0_i32_1 = arith.constant 0 : i32
    return %c0_i32, %c0_i32_0 : i32, i32
  }
  func.func @transform_5(%arg0: i32) -> (i32, i32) {
    %c0_i32 = arith.constant 0 : i32
    %c0_i32_0 = arith.constant 0 : i32
    return %c0_i32, %arg0 : i32, i32
  }
  func.func @transform_6(%arg0: i32) -> (i32, i32) {
    %c0_i32 = arith.constant 0 : i32
    %c0_i32_0 = arith.constant 0 : i32
    return %c0_i32, %arg0 : i32, i32
  }
  func.func @transform_7(%arg0: i32) -> (i32, i32) {
    %c0_i32 = arith.constant 0 : i32
    %c0_i32_0 = arith.constant 0 : i32
    return %c0_i32, %arg0 : i32, i32
  }
}

</mosaic_0001>

<llo_original>
// kernel: tpu_custom_call.1
$region0: #{tpu_custom_call.1}
  #allocation0 [shape = 'u32[]', space=smem, size = 0x4, offset = 0x4, fixed_abs, tag = 'smem constant byte address 0x4 - core index']
  #allocation1 [shape = 'u32[144,128]{1,0:T(1,128)}', space=vmem, size = 0x12000, scoped, tag = 'internal scratch']
  %s0 = inlined_call_operand.hbm [shape: bf16[8,128], index: 0, kind: input, shape index: {}]
  %s1 = inlined_call_operand.hbm [shape: bf16[128,128], index: 1, kind: input, shape index: {}]
  %s2 = inlined_call_operand.vmem [shape: f32[1,128], index: 2, kind: input, shape index: {}]
  %s3 = inlined_call_operand.hbm [shape: bf16[128,256], index: 3, kind: input, shape index: {}]
  %s4 = inlined_call_operand.vmem [shape: f32[2,256], index: 4, kind: input, shape index: {}]
  %s5 = inlined_call_operand.hbm [shape: bf16[256,256], index: 5, kind: input, shape index: {}]
  %s6 = inlined_call_operand.vmem [shape: f32[1,256], index: 6, kind: input, shape index: {}]
  %s7 = inlined_call_operand.hbm [shape: f32[8,256], index: 7, kind: output, shape index: {}]
  %s8 = sld [smem:[#allocation0]]
  $region77: #{tpu_custom_call.1} parent=0
    _
  %s10 = ssub.s32 1, %s8
  %s11 = scalar_select 0, %s10, %s8
  $region1: #{tpu_custom_call.1} parent=0
    #allocation2 [shape = 'u8[2048]{0}', space=vmem, size = 0x800, scoped, tag = 'input window, operand 0, single buffered']
    #allocation3 [shape = 's32[2]{0}', space=sflag, size = 0x8, scoped, tag = 'scoped memory for tpu_custom_call.1']
    #allocation4 [shape = 's32[2]{0}', space=sflag, size = 0x8, scoped, tag = 'scoped memory for tpu_custom_call.1']
    #allocation5 [shape = 'u8[32768]{0}', space=vmem, size = 0x8000, scoped, tag = 'input window, operand 1, single buffered']
    #allocation6 [shape = 's32[1]{0}', space=sflag, size = 0x4, scoped, tag = 'scoped memory for tpu_custom_call.1']
    #allocation7 [shape = 'u8[65536]{0}', space=vmem, size = 0x10000, scoped, tag = 'input window, operand 3, single buffered']
    #allocation8 [shape = 'u8[131072]{0}', space=vmem, size = 0x20000, scoped, tag = 'input window, operand 5']
    #allocation9 [shape = 's32[2]{0}', space=sflag, size = 0x8, scoped, tag = 'scoped memory for tpu_custom_call.1']
    #allocation10 [shape = 'u8[8192]{0}', space=vmem, size = 0x2000, scoped, tag = 'output window, operand 0']
    %12 = vsyncpa [#allocation3], 0
    %13 = vsyncpa [#allocation6], 0
    %14 = vsyncpa [#allocation9], 0
    %s15 = scalar_lea.sflag [#allocation9], 1
    %16 = vsyncpa %s15, 0
    %17 = vsyncpa [#allocation4], 0
    %s18 = scalar_lea.sflag [#allocation4], 1
    %19 = vsyncpa %s18, 0
    loop: start=0, step=1, limit=4
    $region2: #{tpu_custom_call.1} parent=1 // loop_pre_header
      _
    $region3: #{tpu_custom_call.1} parent=1 // loop_header
      %s21 = sphi 0, %s25
      %p22 = scmp.ge.s32.totalorder %s21, 4
      %s29 = sphi 0, %s29
      %s31 = sphi 0, %s29
      %s32 = sphi 0, %s31
      %s46 = sphi 0, %s32
      %s50 = sphi 0, %s50
      %s52 = sphi 0, %s50
      %s53 = sphi 0, %s52
      %s67 = sphi 0, %s53
      %s71 = sphi 0, %s71
      %s73 = sphi 0, %s71
      %s74 = sphi 0, %s73
      %s88 = sphi 0, %s74
      %s92 = sphi 0, %s92
      %s94 = sphi 0, %s92
      %s95 = sphi 0, %s94
      %s109 = sphi 0, %s95
      %s113 = sphi 0, %s113
      %s115 = sphi 0, %s113
      %s116 = sphi 0, %s115
      %s130 = sphi 0, %s116
      %s136 = sphi 0, %s138
      %s139 = sphi 0, %s136
      %s140 = sphi 0, %s139
      %s156 = sphi 0, %s140
      %s162 = sphi 0, %s164
      %s165 = sphi 0, %s162
      %s166 = sphi 0, %s165
      %s182 = sphi 0, %s166
      %s188 = sphi 0, %s190
      %s191 = sphi 0, %s188
      %s192 = sphi 0, %s191
      %s208 = sphi 0, %s192
    $region4: #{tpu_custom_call.1} parent=1 // loop_header_branch
      %24 = sbr.rel (%p22) target = $region8
    $region5: #{tpu_custom_call.1} parent=1 // loop_body
      %s26 = ssub.s32 %s21, 1
      %s27 = ssub.s32 %s21, 2
      %s28 = sadd.s32 %s21, 1
      %s30 = sadd.s32 %s29, 1
      %p33 = scmp.eq.s32.totalorder %s21, 1
      %p34 = scmp.ne.s32.totalorder %s29, %s31
      %p35 = scmp.eq.s32.totalorder %s21, 0
      %p36 = por %p34, %p35
      %p37 = scmp.ne.s32.totalorder %s29, %s31
      %p38 = scmp.eq.s32.totalorder %s26, 1
      %p39 = por %p37, %p38
      %p40 = scmp.ne.s32.totalorder %s31, %s32
      %p41 = scmp.eq.s32.totalorder %s26, 0
      %p42 = por %p40, %p41
      %p43 = scmp.ne.s32.totalorder %s31, %s32
      %p44 = scmp.eq.s32.totalorder %s27, 1
      %p45 = por %p43, %p44
      %p47 = scmp.ne.s32.totalorder %s32, %s46
      %p48 = scmp.eq.s32.totalorder %s27, 0
      %p49 = por %p47, %p48
      %s51 = sadd.s32 %s50, 1
      %p54 = scmp.eq.s32.totalorder %s21, 1
      %p55 = scmp.ne.s32.totalorder %s50, %s52
      %p56 = scmp.eq.s32.totalorder %s21, 0
      %p57 = por %p55, %p56
      %p58 = scmp.ne.s32.totalorder %s50, %s52
      %p59 = scmp.eq.s32.totalorder %s26, 1
      %p60 = por %p58, %p59
      %p61 = scmp.ne.s32.totalorder %s52, %s53
      %p62 = scmp.eq.s32.totalorder %s26, 0
      %p63 = por %p61, %p62
      %p64 = scmp.ne.s32.totalorder %s52, %s53
      %p65 = scmp.eq.s32.totalorder %s27, 1
      %p66 = por %p64, %p65
      %p68 = scmp.ne.s32.totalorder %s53, %s67
      %p69 = scmp.eq.s32.totalorder %s27, 0
      %p70 = por %p68, %p69
      %s72 = sadd.s32 %s71, 1
      %p75 = scmp.eq.s32.totalorder %s21, 1
      %p76 = scmp.ne.s32.totalorder %s71, %s73
      %p77 = scmp.eq.s32.totalorder %s21, 0
      %p78 = por %p76, %p77
      %p79 = scmp.ne.s32.totalorder %s71, %s73
      %p80 = scmp.eq.s32.totalorder %s26, 1
      %p81 = por %p79, %p80
      %p82 = scmp.ne.s32.totalorder %s73, %s74
      %p83 = scmp.eq.s32.totalorder %s26, 0
      %p84 = por %p82, %p83
      %p85 = scmp.ne.s32.totalorder %s73, %s74
      %p86 = scmp.eq.s32.totalorder %s27, 1
      %p87 = por %p85, %p86
      %p89 = scmp.ne.s32.totalorder %s74, %s88
      %p90 = scmp.eq.s32.totalorder %s27, 0
      %p91 = por %p89, %p90
      %s93 = sadd.s32 %s92, 1
      %p96 = scmp.eq.s32.totalorder %s21, 1
      %p97 = scmp.ne.s32.totalorder %s92, %s94
      %p98 = scmp.eq.s32.totalorder %s21, 0
      %p99 = por %p97, %p98
      %p100 = scmp.ne.s32.totalorder %s92, %s94
      %p101 = scmp.eq.s32.totalorder %s26, 1
      %p102 = por %p100, %p101
      %p103 = scmp.ne.s32.totalorder %s94, %s95
      %p104 = scmp.eq.s32.totalorder %s26, 0
      %p105 = por %p103, %p104
      %p106 = scmp.ne.s32.totalorder %s94, %s95
      %p107 = scmp.eq.s32.totalorder %s27, 1
      %p108 = por %p106, %p107
      %p110 = scmp.ne.s32.totalorder %s95, %s109
      %p111 = scmp.eq.s32.totalorder %s27, 0
      %p112 = por %p110, %p111
      %s114 = sadd.s32 %s113, 1
      %p117 = scmp.eq.s32.totalorder %s21, 1
      %p118 = scmp.ne.s32.totalorder %s113, %s115
      %p119 = scmp.eq.s32.totalorder %s21, 0
      %p120 = por %p118, %p119
      %p121 = scmp.ne.s32.totalorder %s113, %s115
      %p122 = scmp.eq.s32.totalorder %s26, 1
      %p123 = por %p121, %p122
      %p124 = scmp.ne.s32.totalorder %s115, %s116
      %p125 = scmp.eq.s32.totalorder %s26, 0
      %p126 = por %p124, %p125
      %p127 = scmp.ne.s32.totalorder %s115, %s116
      %p128 = scmp.eq.s32.totalorder %s27, 1
      %p129 = por %p127, %p128
      %p131 = scmp.ne.s32.totalorder %s116, %s130
      %p132 = scmp.eq.s32.totalorder %s27, 0
      %p133 = por %p131, %p132
      %s134 = ssub.s32 %s21, %s28
      %p135 = scmp.eq.s32.totalorder %s134, 0
      %s137 = sadd.s32 %s136, 1
      %s138 = scalar_select %p135, %s136, %s137
      %p141 = pneg %p135
      %p142 = scmp.eq.s32.totalorder %s21, 1
      %p143 = por %p141, %p142
      %p144 = scmp.ne.s32.totalorder %s136, %s139
      %p145 = scmp.eq.s32.totalorder %s21, 0
      %p146 = por %p144, %p145
      %p147 = scmp.ne.s32.totalorder %s136, %s139
      %p148 = scmp.eq.s32.totalorder %s26, 1
      %p149 = por %p147, %p148
      %p150 = scmp.ne.s32.totalorder %s139, %s140
      %p151 = scmp.eq.s32.totalorder %s26, 0
      %p152 = por %p150, %p151
      %p153 = scmp.ne.s32.totalorder %s139, %s140
      %p154 = scmp.eq.s32.totalorder %s27, 1
      %p155 = por %p153, %p154
      %p157 = scmp.ne.s32.totalorder %s140, %s156
      %p158 = scmp.eq.s32.totalorder %s27, 0
      %p159 = por %p157, %p158
      %s160 = ssub.s32 %s21, %s28
      %p161 = scmp.eq.s32.totalorder %s160, 0
      %s163 = sadd.s32 %s162, 1
      %s164 = scalar_select %p161, %s162, %s163
      %p167 = pneg %p161
      %p168 = scmp.eq.s32.totalorder %s21, 1
      %p169 = por %p167, %p168
      %p170 = scmp.ne.s32.totalorder %s162, %s165
      %p171 = scmp.eq.s32.totalorder %s21, 0
      %p172 = por %p170, %p171
      %p173 = scmp.ne.s32.totalorder %s162, %s165
      %p174 = scmp.eq.s32.totalorder %s26, 1
      %p175 = por %p173, %p174
      %p176 = scmp.ne.s32.totalorder %s165, %s166
      %p177 = scmp.eq.s32.totalorder %s26, 0
      %p178 = por %p176, %p177
      %p179 = scmp.ne.s32.totalorder %s165, %s166
      %p180 = scmp.eq.s32.totalorder %s27, 1
      %p181 = por %p179, %p180
      %p183 = scmp.ne.s32.totalorder %s166, %s182
      %p184 = scmp.eq.s32.totalorder %s27, 0
      %p185 = por %p183, %p184
      %s186 = ssub.s32 %s21, %s28
      %p187 = scmp.eq.s32.totalorder %s186, 0
      %s189 = sadd.s32 %s188, 1
      %s190 = scalar_select %p187, %s188, %s189
      %p193 = pneg %p187
      %p194 = scmp.eq.s32.totalorder %s21, 1
      %p195 = por %p193, %p194
      %p196 = scmp.ne.s32.totalorder %s188, %s191
      %p197 = scmp.eq.s32.totalorder %s21, 0
      %p198 = por %p196, %p197
      %p199 = scmp.ne.s32.totalorder %s188, %s191
      %p200 = scmp.eq.s32.totalorder %s26, 1
      %p201 = por %p199, %p200
      %p202 = scmp.ne.s32.totalorder %s191, %s192
      %p203 = scmp.eq.s32.totalorder %s26, 0
      %p204 = por %p202, %p203
      %p205 = scmp.ne.s32.totalorder %s191, %s192
      %p206 = scmp.eq.s32.totalorder %s27, 1
      %p207 = por %p205, %p206
      %p209 = scmp.ne.s32.totalorder %s192, %s208
      %p210 = scmp.eq.s32.totalorder %s27, 0
      %p211 = por %p209, %p210
      %p212 = scmp.le.s32.totalorder 1, %s21
      %p213 = scmp.lt.s32.totalorder %s21, 3
      %p214 = pnand %p212, %p213
      %p215 = pneg %p214
      // Predicated region
      $region9: #{tpu_custom_call.1} parent=5 // pred_check
        _
      $region10: #{tpu_custom_call.1} parent=5 // pred_check_branch
        %217 = sbr.rel (%p214) target = $region12
      $region11: #{tpu_custom_call.1} parent=5 // pred_region
        %s218 = ssub.s32 %s21, 1
        // Predicated region
        $region13: #{tpu_custom_call.1} parent=11 // pred_check
          %p219 = pneg %p42
        $region14: #{tpu_custom_call.1} parent=11 // pred_check_branch
          %221 = sbr.rel (%p219) target = $region16
        $region15: #{tpu_custom_call.1} parent=11 // pred_region
          %s223 = ssub.s32 64, 64
          %224 = vsyncadd [#allocation3], %s223
          %s226 = sshll.u32 [#allocation2], 4
          %s227 = int_to_ptr.vmem [resolvable:$true] %s226
          %229 = dma.hbm_to_vmem [thread:$0]  %s0, 64, %s227, [#allocation3]
        $region16: #{tpu_custom_call.1} parent=11 // pred_fallthru
          _
        // Predicated region
        $region17: #{tpu_custom_call.1} parent=11 // pred_check
          %p230 = pneg %p63
        $region18: #{tpu_custom_call.1} parent=11 // pred_check_branch
          %232 = sbr.rel (%p230) target = $region20
        $region19: #{tpu_custom_call.1} parent=11 // pred_region
          %s234 = ssub.s32 1024, 1024
          %235 = vsyncadd [#allocation6], %s234
          %s236 = sshll.u32 [#allocation5], 4
          %s237 = int_to_ptr.vmem [resolvable:$true] %s236
          %242 = dma.hbm_to_vmem [thread:$0]  %s1, 1024, %s237, [#allocation6], 64, 64, 4
        $region20: #{tpu_custom_call.1} parent=11 // pred_fallthru
          _
        // Predicated region
        $region21: #{tpu_custom_call.1} parent=11 // pred_check
          %p243 = pneg %p84
        $region22: #{tpu_custom_call.1} parent=11 // pred_check_branch
          %245 = sbr.rel (%p243) target = $region24
        $region23: #{tpu_custom_call.1} parent=11 // pred_region
          _
        $region24: #{tpu_custom_call.1} parent=11 // pred_fallthru
          _
        // Predicated region
        $region25: #{tpu_custom_call.1} parent=11 // pred_check
          %p246 = pneg %p105
        $region26: #{tpu_custom_call.1} parent=11 // pred_check_branch
          %248 = sbr.rel (%p246) target = $region28
        $region27: #{tpu_custom_call.1} parent=11 // pred_region
          %s250 = ssub.s32 2048, 2048
          %251 = vsyncadd [#allocation6], %s250
          %s252 = sshll.u32 [#allocation7], 4
          %s253 = int_to_ptr.vmem [resolvable:$true] %s252
          %258 = dma.hbm_to_vmem [thread:$0]  %s3, 2048, %s253, [#allocation6], 128, 128, 8
        $region28: #{tpu_custom_call.1} parent=11 // pred_fallthru
          _
        // Predicated region
        $region29: #{tpu_custom_call.1} parent=11 // pred_check
          %p259 = pneg %p126
        $region30: #{tpu_custom_call.1} parent=11 // pred_check_branch
          %261 = sbr.rel (%p259) target = $region32
        $region31: #{tpu_custom_call.1} parent=11 // pred_region
          _
        $region32: #{tpu_custom_call.1} parent=11 // pred_fallthru
          _
      $region12: #{tpu_custom_call.1} parent=5 // pred_fallthru
        _
      %p262 = scmp.lt.s32.totalorder %s21, 2
      // Predicated region
      $region33: #{tpu_custom_call.1} parent=5 // pred_check
        %p263 = pneg %p262
      $region34: #{tpu_custom_call.1} parent=5 // pred_check_branch
        %265 = sbr.rel (%p263) target = $region36
      $region35: #{tpu_custom_call.1} parent=5 // pred_region
        // Predicated region
        $region37: #{tpu_custom_call.1} parent=35 // pred_check
          %p266 = pneg %p146
        $region38: #{tpu_custom_call.1} parent=35 // pred_check_branch
          %268 = sbr.rel (%p266) target = $region40
        $region39: #{tpu_custom_call.1} parent=35 // pred_region
          %s269 = sand.u32 %s136, 1
          %s270 = scalar_lea.sflag [#allocation9], %s269
          %s271 = sand.u32 %s136, 1
          %s272 = smul.addr %s271, 128
          %s273 = scalar_lea.vmem [#allocation8], %s272
          %s275 = ssub.s32 2048, 2048
          %276 = vsyncadd %s270, %s275
          %s277 = smul.addr %s21, 64
          %s278 = scalar_lea.hbm %s5, %s277
          %s279 = sshll.u32 %s273, 4
          %s280 = int_to_ptr.vmem [resolvable:$true] %s279
          %285 = dma.hbm_to_vmem [thread:$0]  %s278, 2048, %s280, %s270, 128, 64, 4
        $region40: #{tpu_custom_call.1} parent=35 // pred_fallthru
          _
        // Predicated region
        $region41: #{tpu_custom_call.1} parent=35 // pred_check
          %p286 = pneg %p172
        $region42: #{tpu_custom_call.1} parent=35 // pred_check_branch
          %288 = sbr.rel (%p286) target = $region44
        $region43: #{tpu_custom_call.1} parent=35 // pred_region
          %p289 = scmp.lt.s32.totalorder %s21, 1
          %s290 = scalar_select %p289, %s21, 1
          %s291 = scalar_lea.vmem %s6, %s290
        $region44: #{tpu_custom_call.1} parent=35 // pred_fallthru
          _
      $region36: #{tpu_custom_call.1} parent=5 // pred_fallthru
        _
      %p292 = scmp.le.s32.totalorder 1, %s21
      %p293 = scmp.lt.s32.totalorder %s21, 3
      %p294 = pnand %p292, %p293
      %p295 = pneg %p294
      // Predicated region
      $region45: #{tpu_custom_call.1} parent=5 // pred_check
        _
      $region46: #{tpu_custom_call.1} parent=5 // pred_check_branch
        %297 = sbr.rel (%p294) target = $region48
      $region47: #{tpu_custom_call.1} parent=5 // pred_region
        %s298 = ssub.s32 %s21, 1
        // Predicated region
        $region49: #{tpu_custom_call.1} parent=47 // pred_check
          %p299 = pneg %p42
        $region50: #{tpu_custom_call.1} parent=47 // pred_check_branch
          %301 = sbr.rel (%p299) target = $region52
        $region51: #{tpu_custom_call.1} parent=47 // pred_region
          %302 = dma.done [#allocation3], 64
        $region52: #{tpu_custom_call.1} parent=47 // pred_fallthru
          _
        // Predicated region
        $region53: #{tpu_custom_call.1} parent=47 // pred_check
          %p303 = pneg %p63
        $region54: #{tpu_custom_call.1} parent=47 // pred_check_branch
          %305 = sbr.rel (%p303) target = $region56
        $region55: #{tpu_custom_call.1} parent=47 // pred_region
          %306 = dma.done [#allocation6], 1024
        $region56: #{tpu_custom_call.1} parent=47 // pred_fallthru
          _
        // Predicated region
        $region57: #{tpu_custom_call.1} parent=47 // pred_check
          %p307 = pneg %p105
        $region58: #{tpu_custom_call.1} parent=47 // pred_check_branch
          %309 = sbr.rel (%p307) target = $region60
        $region59: #{tpu_custom_call.1} parent=47 // pred_region
          %310 = dma.done [#allocation6], 2048
        $region60: #{tpu_custom_call.1} parent=47 // pred_fallthru
          _
        %s311 = sand.u32 %s139, 1
        %s312 = scalar_lea.sflag [#allocation9], %s311
        %s313 = sand.u32 %s139, 1
        %s314 = smul.addr %s313, 128
        %s315 = scalar_lea.vmem [#allocation8], %s314
        // Predicated region
        $region61: #{tpu_custom_call.1} parent=47 // pred_check
          %p316 = pneg %p152
        $region62: #{tpu_custom_call.1} parent=47 // pred_check_branch
          %318 = sbr.rel (%p316) target = $region64
        $region63: #{tpu_custom_call.1} parent=47 // pred_region
          %319 = dma.done %s312, 2048
        $region64: #{tpu_custom_call.1} parent=47 // pred_fallthru
          _
        %p320 = pneg %p42
        %p321 = pneg %p39
        %p322 = pneg %p63
        %p323 = pneg %p60
        %p324 = pneg %p84
        %p325 = pneg %p81
        %p326 = pneg %p105
        %p327 = pneg %p102
        %p328 = pneg %p126
        %p329 = pneg %p123
        %s330 = sand.u32 %s139, 1
        %s331 = scalar_lea.sflag [#allocation9], %s330
        %s332 = sand.u32 %s139, 1
        %s333 = smul.addr %s332, 128
        %s334 = scalar_lea.vmem [#allocation8], %s333
        %p335 = pneg %p152
        %p336 = pneg %p149
        %p337 = scmp.lt.s32.totalorder %s26, 1
        %s338 = scalar_select %p337, %s26, 1
        %s339 = scalar_lea.vmem %s6, %s338
        %p340 = pneg %p178
        %p341 = pneg %p175
        %p342 = pneg %p204
        %p343 = pneg %p201
        %s344 = sand.u32 %s191, 1
        %s345 = scalar_lea.sflag [#allocation4], %s344
        %s346 = sand.u32 %s191, 1
        %s347 = smul.addr %s346, 8
        %s348 = scalar_lea.vmem [#allocation10], %s347
        %p349 = scmp.lt.s32.totalorder %s26, 1
        %s350 = scalar_select %p349, %s26, 1
        %s351 = scalar_lea.vmem %s6, %s350
        %v353 = vld [vmem:[#allocation2] sm:$0xf]
        %v354 = vld [vmem:[#allocation5] sm:$0xf]
        %v355 = vld [vmem:[#allocation5 + $0x4] sm:$0xf]
        %v356 = vld [vmem:[#allocation5 + $0x8] sm:$0xf]
        %v357 = vld [vmem:[#allocation5 + $0xc] sm:$0xf]
        %v358 = vld [vmem:[#allocation5 + $0x10] sm:$0xf]
        %v359 = vld [vmem:[#allocation5 + $0x14] sm:$0xf]
        %v360 = vld [vmem:[#allocation5 + $0x18] sm:$0xf]
        %v361 = vld [vmem:[#allocation5 + $0x1c] sm:$0xf]
        %v362 = vld [vmem:[#allocation5 + $0x20] sm:$0xf]
        %v363 = vld [vmem:[#allocation5 + $0x24] sm:$0xf]
        %v364 = vld [vmem:[#allocation5 + $0x28] sm:$0xf]
        %v365 = vld [vmem:[#allocation5 + $0x2c] sm:$0xf]
        %v366 = vld [vmem:[#allocation5 + $0x30] sm:$0xf]
        %v367 = vld [vmem:[#allocation5 + $0x34] sm:$0xf]
        %v368 = vld [vmem:[#allocation5 + $0x38] sm:$0xf]
        %v369 = vld [vmem:[#allocation5 + $0x3c] sm:$0xf]
        %v370 = vld [vmem:[%s2] sm:$0x1]
        %v372 = vlaneseq
        %v373 = vshrl.u32 %v372, 7
        %v374 = vsub.s32 0, %v373
        %v375 = vrot.slane %v370, %v374
        %v393 = vunpack.c.l.b16 %v354
        %v394 = vunpack.c.l.b16 %v355
        %v395 = vunpack.c.l.b16 %v356
        %v396 = vunpack.c.l.b16 %v357
        %v397 = vunpack.c.l.b16 %v358
        %v398 = vunpack.c.l.b16 %v359
        %v399 = vunpack.c.l.b16 %v360
        %v400 = vunpack.c.l.b16 %v361
        %v401 = vunpack.c.l.b16 %v362
        %v402 = vunpack.c.l.b16 %v363
        %v403 = vunpack.c.l.b16 %v364
        %v404 = vunpack.c.l.b16 %v365
        %v405 = vunpack.c.l.b16 %v366
        %v406 = vunpack.c.l.b16 %v367
        %v407 = vunpack.c.l.b16 %v368
        %v408 = vunpack.c.l.b16 %v369
        %v409 = vpack.c.b16 %v394, %v393
        %v410 = vpack.c.b16 %v396, %v395
        %v411 = vpack.c.b16 %v398, %v397
        %v412 = vpack.c.b16 %v400, %v399
        %v413 = vpack.c.b16 %v402, %v401
        %v414 = vpack.c.b16 %v404, %v403
        %v415 = vpack.c.b16 %v406, %v405
        %v416 = vpack.c.b16 %v408, %v407
        %425 = vmatprep.subr.bf16.mxu0 0
        %426 = vmatpush1.bf16.msra.mxu0 %v416
        %427 = vmatprep.subr.bf16.mxu0 0
        %428 = vmatpush1.bf16.msra.mxu0 %v415
        %429 = vmatprep.subr.bf16.mxu0 0
        %430 = vmatpush1.bf16.msra.mxu0 %v414
        %431 = vmatprep.subr.bf16.mxu0 0
        %432 = vmatpush1.bf16.msra.mxu0 %v413
        %433 = vmatprep.subr.bf16.mxu0 0
        %434 = vmatpush1.bf16.msra.mxu0 %v412
        %435 = vmatprep.subr.bf16.mxu0 0
        %436 = vmatpush1.bf16.msra.mxu0 %v411
        %437 = vmatprep.subr.bf16.mxu0 0
        %438 = vmatpush1.bf16.msra.mxu0 %v410
        %439 = vmatprep.subr.bf16.mxu0 0
        %440 = vmatpush1.bf16.msra.mxu0 %v409
        %441 = vmatprep.subr.bf16.mxu0 0
        %442 = vmatpush2.bf16.msra.mxu0 0
        %443 = vmatprep.subr.bf16.mxu0 0
        %444 = vmatpush2.bf16.msra.mxu0 0
        %445 = vmatprep.subr.bf16.mxu0 0
        %446 = vmatpush2.bf16.msra.mxu0 0
        %447 = vmatprep.subr.bf16.mxu0 0
        %448 = vmatpush2.bf16.msra.mxu0 0
        %449 = vmatprep.subr.bf16.mxu0 0
        %450 = vmatpush2.bf16.msra.mxu0 0
        %451 = vmatprep.subr.bf16.mxu0 0
        %452 = vmatpush2.bf16.msra.mxu0 0
        %453 = vmatprep.subr.bf16.mxu0 0
        %454 = vmatpush2.bf16.msra.mxu0 0
        %455 = vmatprep.subr.bf16.mxu0 0
        %456 = vmatpush2.bf16.msra.mxu0 0
        %457 = vmatprep.mubr.bf16.mxu0 0
        %458 = vmatmul.mubr.bf16.gmra.mxu0 %v353
        %v459 = vpop.f32.mrf.mxu0
        %v460 = vadd.f32 %v375, %v459
        %v461 = vpop.f32.mrf.mxu0
        %v462 = vpop.f32.mrf.mxu0
        %v463 = vpop.f32.mrf.mxu0
        %464 = vdwg.mxu0
        %vm465 = vcmp.ge.f32.partialorder %v460, 0.0
        %v466 = vmul.f32 %v460, 0.2
        %v467 = vsel %vm465, %v460, %v466
        %v468 = vpack.c.bf16 %v467, %v467
        %v469 = vld [vmem:[#allocation7] sm:$0xff]
        %v470 = vld [vmem:[#allocation7 + $0x8] sm:$0xff]
        %v471 = vld [vmem:[#allocation7 + $0x10] sm:$0xff]
        %v472 = vld [vmem:[#allocation7 + $0x18] sm:$0xff]
        %v473 = vld [vmem:[#allocation7 + $0x20] sm:$0xff]
        %v474 = vld [vmem:[#allocation7 + $0x28] sm:$0xff]
        %v475 = vld [vmem:[#allocation7 + $0x30] sm:$0xff]
        %v476 = vld [vmem:[#allocation7 + $0x38] sm:$0xff]
        %v477 = vld [vmem:[#allocation7 + $0x40] sm:$0xff]
        %v478 = vld [vmem:[#allocation7 + $0x48] sm:$0xff]
        %v479 = vld [vmem:[#allocation7 + $0x50] sm:$0xff]
        %v480 = vld [vmem:[#allocation7 + $0x58] sm:$0xff]
        %v481 = vld [vmem:[#allocation7 + $0x60] sm:$0xff]
        %v482 = vld [vmem:[#allocation7 + $0x68] sm:$0xff]
        %v483 = vld [vmem:[#allocation7 + $0x70] sm:$0xff]
        %v484 = vld [vmem:[#allocation7 + $0x78] sm:$0xff]
        %v501 = vunpack.c.l.b16 %v469
        %v502 = vunpack.c.h.b16 %v469
        %v503 = vunpack.c.l.b16 %v470
        %v504 = vunpack.c.h.b16 %v470
        %v505 = vunpack.c.l.b16 %v471
        %v506 = vunpack.c.h.b16 %v471
        %v507 = vunpack.c.l.b16 %v472
        %v508 = vunpack.c.h.b16 %v472
        %v509 = vunpack.c.l.b16 %v473
        %v510 = vunpack.c.h.b16 %v473
        %v511 = vunpack.c.l.b16 %v474
        %v512 = vunpack.c.h.b16 %v474
        %v513 = vunpack.c.l.b16 %v475
        %v514 = vunpack.c.h.b16 %v475
        %v515 = vunpack.c.l.b16 %v476
        %v516 = vunpack.c.h.b16 %v476
        %v517 = vunpack.c.l.b16 %v477
        %v518 = vunpack.c.h.b16 %v477
        %v519 = vunpack.c.l.b16 %v478
        %v520 = vunpack.c.h.b16 %v478
        %v521 = vunpack.c.l.b16 %v479
        %v522 = vunpack.c.h.b16 %v479
        %v523 = vunpack.c.l.b16 %v480
        %v524 = vunpack.c.h.b16 %v480
        %v525 = vunpack.c.l.b16 %v481
        %v526 = vunpack.c.h.b16 %v481
        %v527 = vunpack.c.l.b16 %v482
        %v528 = vunpack.c.h.b16 %v482
        %v529 = vunpack.c.l.b16 %v483
        %v530 = vunpack.c.h.b16 %v483
        %v531 = vunpack.c.l.b16 %v484
        %v532 = vunpack.c.h.b16 %v484
        %v533 = vpack.c.b16 %v503, %v501
        %v534 = vpack.c.b16 %v504, %v502
        %v535 = vpack.c.b16 %v507, %v505
        %v536 = vpack.c.b16 %v508, %v506
        %v537 = vpack.c.b16 %v511, %v509
        %v538 = vpack.c.b16 %v512, %v510
        %v539 = vpack.c.b16 %v515, %v513
        %v540 = vpack.c.b16 %v516, %v514
        %v541 = vpack.c.b16 %v519, %v517
        %v542 = vpack.c.b16 %v520, %v518
        %v543 = vpack.c.b16 %v523, %v521
        %v544 = vpack.c.b16 %v524, %v522
        %v545 = vpack.c.b16 %v527, %v525
        %v546 = vpack.c.b16 %v528, %v526
        %v547 = vpack.c.b16 %v531, %v529
        %v548 = vpack.c.b16 %v532, %v530
        %565 = vmatprep.subr.bf16.mxu0 %v548
        %566 = vmatpush1.bf16.msra.mxu0 %v547
        %567 = vmatprep.subr.bf16.mxu0 %v546
        %568 = vmatpush1.bf16.msra.mxu0 %v545
        %569 = vmatprep.subr.bf16.mxu0 %v544
        %570 = vmatpush1.bf16.msra.mxu0 %v543
        %571 = vmatprep.subr.bf16.mxu0 %v542
        %572 = vmatpush1.bf16.msra.mxu0 %v541
        %573 = vmatprep.subr.bf16.mxu0 %v540
        %574 = vmatpush1.bf16.msra.mxu0 %v539
        %575 = vmatprep.subr.bf16.mxu0 %v538
        %576 = vmatpush1.bf16.msra.mxu0 %v537
        %577 = vmatprep.subr.bf16.mxu0 %v536
        %578 = vmatpush1.bf16.msra.mxu0 %v535
        %579 = vmatprep.subr.bf16.mxu0 %v534
        %580 = vmatpush1.bf16.msra.mxu0 %v533
        %581 = vmatprep.subr.bf16.mxu0 0
        %582 = vmatpush2.bf16.msra.mxu0 0
        %583 = vmatprep.subr.bf16.mxu0 0
        %584 = vmatpush2.bf16.msra.mxu0 0
        %585 = vmatprep.subr.bf16.mxu0 0
        %586 = vmatpush2.bf16.msra.mxu0 0
        %587 = vmatprep.subr.bf16.mxu0 0
        %588 = vmatpush2.bf16.msra.mxu0 0
        %589 = vmatprep.subr.bf16.mxu0 0
        %590 = vmatpush2.bf16.msra.mxu0 0
        %591 = vmatprep.subr.bf16.mxu0 0
        %592 = vmatpush2.bf16.msra.mxu0 0
        %593 = vmatprep.subr.bf16.mxu0 0
        %594 = vmatpush2.bf16.msra.mxu0 0
        %595 = vmatprep.subr.bf16.mxu0 0
        %596 = vmatpush2.bf16.msra.mxu0 0
        %597 = vmatprep.mubr.bf16.mxu0 0
        %598 = vmatmul.mubr.bf16.gmra.mxu0 %v468
        %v599 = vpop.f32.mrf.mxu0
        %v600 = vadd.f32 0.0, %v599
        %v601 = vpop.f32.mrf.mxu0
        %v602 = vadd.f32 0.0, %v601
        %v603 = vpop.f32.mrf.mxu0
        %v604 = vpop.f32.mrf.mxu0
        %605 = vdwg.mxu0
        %v606 = vrot.slane %v600, 4
        %v607 = vadd.f32 %v600, %v606
        %v608 = vrot.slane %v607, 2
        %v609 = vadd.f32 %v607, %v608
        %v610 = vrot.slane %v609, 1
        %v611 = vadd.f32 %v609, %v610
        %v612 = vrot.slane %v602, 4
        %v613 = vadd.f32 %v602, %v612
        %v614 = vrot.slane %v613, 2
        %v615 = vadd.f32 %v613, %v614
        %v616 = vrot.slane %v615, 1
        %v617 = vadd.f32 %v615, %v616
        %v618 = vmul.f32 %v611, 0.125
        %v619 = vmul.f32 %v617, 0.125
        %v620 = vsub.f32 %v600, %v618
        %v621 = vsub.f32 %v602, %v619
        %v622 = vmul.f32 %v620, %v620
        %v623 = vmul.f32 %v621, %v621
        %v624 = vrot.slane %v622, 4
        %v625 = vadd.f32 %v622, %v624
        %v626 = vrot.slane %v625, 2
        %v627 = vadd.f32 %v625, %v626
        %v628 = vrot.slane %v627, 1
        %v629 = vadd.f32 %v627, %v628
        %v630 = vrot.slane %v623, 4
        %v631 = vadd.f32 %v623, %v630
        %v632 = vrot.slane %v631, 2
        %v633 = vadd.f32 %v631, %v632
        %v634 = vrot.slane %v633, 1
        %v635 = vadd.f32 %v633, %v634
        %v636 = vmul.f32 %v629, 0.125
        %v637 = vmul.f32 %v635, 0.125
        %v638 = vld [vmem:[%s4] ss:$2 sm:$0x3]
        %s639 = scalar_lea.vmem %s4, 1
        %v640 = vld [vmem:[%s639] ss:$2 sm:$0x3]
        %v641 = vadd.f32 %v636, 0.8
        %v642 = vadd.f32 %v637, 0.8
        %v643 = vrsqrt.pop %v641
        %v644 = vrsqrt.pop %v642
        %v647 = vcombine.low %v643, %v644
        %v649 = vunpack.c.l.s4 1966171168
        %v650 = vunpack.c.0.s8 %v649
        %v651 = vlaneseq
        %v652 = vshrl.u32 %v651, 7
        %v653 = vsub.s32 %v650, %v652
        %v654 = vrot.slane %v647, %v653
        %v656 = vunpack.c.l.s4 1966171168
        %v657 = vunpack.c.0.s8 %v656
        %v658 = vlaneseq
        %v659 = vshrl.u32 %v658, 7
        %v660 = vsub.s32 %v657, %v659
        %v661 = vrot.slane %v654, %v660
        %v663 = vmul.f32 %v638, %v661
        %v665 = vlaneseq
        %v666 = vshrl.u32 %v665, 7
        %v667 = vsub.s32 0, %v666
        %v668 = vrot.slane %v663, %v667
        %v669 = vlaneseq
        %v670 = vshrl.u32 %v669, 7
        %v671 = vsub.s32 1, %v670
        %v672 = vrot.slane %v663, %v671
        %v675 = vmul.f32 %v620, %v668
        %v676 = vmul.f32 %v621, %v672
        %v678 = vlaneseq
        %v679 = vshrl.u32 %v678, 7
        %v680 = vsub.s32 0, %v679
        %v681 = vrot.slane %v640, %v680
        %v682 = vlaneseq
        %v683 = vshrl.u32 %v682, 7
        %v684 = vsub.s32 1, %v683
        %v685 = vrot.slane %v640, %v684
        %v688 = vadd.f32 %v675, %v681
        %v689 = vadd.f32 %v676, %v685
        %vm690 = vcmp.ge.f32.partialorder %v688, 0.0
        %vm691 = vcmp.ge.f32.partialorder %v689, 0.0
        %v692 = vmul.f32 %v688, 0.2
        %v693 = vmul.f32 %v689, 0.2
        %v694 = vsel %vm690, %v688, %v692
        %v695 = vsel %vm691, %v689, %v693
        %v696 = vpack.c.bf16 %v694, %v694
        %v697 = vpack.c.bf16 %v695, %v695
        %v698 = vld [vmem:[%s315] sm:$0xf]
        %v699 = vld [vmem:[%s315 + $0x4] sm:$0xf]
        %v700 = vld [vmem:[%s315 + $0x8] sm:$0xf]
        %v701 = vld [vmem:[%s315 + $0xc] sm:$0xf]
        %v702 = vld [vmem:[%s315 + $0x10] sm:$0xf]
        %v703 = vld [vmem:[%s315 + $0x14] sm:$0xf]
        %v704 = vld [vmem:[%s315 + $0x18] sm:$0xf]
        %v705 = vld [vmem:[%s315 + $0x1c] sm:$0xf]
        %v706 = vld [vmem:[%s315 + $0x20] sm:$0xf]
        %v707 = vld [vmem:[%s315 + $0x24] sm:$0xf]
        %v708 = vld [vmem:[%s315 + $0x28] sm:$0xf]
        %v709 = vld [vmem:[%s315 + $0x2c] sm:$0xf]
        %v710 = vld [vmem:[%s315 + $0x30] sm:$0xf]
        %v711 = vld [vmem:[%s315 + $0x34] sm:$0xf]
        %v712 = vld [vmem:[%s315 + $0x38] sm:$0xf]
        %v713 = vld [vmem:[%s315 + $0x3c] sm:$0xf]
        %v714 = vld [vmem:[%s315 + $0x40] sm:$0xf]
        %v715 = vld [vmem:[%s315 + $0x44] sm:$0xf]
        %v716 = vld [vmem:[%s315 + $0x48] sm:$0xf]
        %v717 = vld [vmem:[%s315 + $0x4c] sm:$0xf]
        %v718 = vld [vmem:[%s315 + $0x50] sm:$0xf]
        %v719 = vld [vmem:[%s315 + $0x54] sm:$0xf]
        %v720 = vld [vmem:[%s315 + $0x58] sm:$0xf]
        %v721 = vld [vmem:[%s315 + $0x5c] sm:$0xf]
        %v722 = vld [vmem:[%s315 + $0x60] sm:$0xf]
        %v723 = vld [vmem:[%s315 + $0x64] sm:$0xf]
        %v724 = vld [vmem:[%s315 + $0x68] sm:$0xf]
        %v725 = vld [vmem:[%s315 + $0x6c] sm:$0xf]
        %v726 = vld [vmem:[%s315 + $0x70] sm:$0xf]
        %v727 = vld [vmem:[%s315 + $0x74] sm:$0xf]
        %v728 = vld [vmem:[%s315 + $0x78] sm:$0xf]
        %v729 = vld [vmem:[%s315 + $0x7c] sm:$0xf]
        %v730 = vld [vmem:[%s351] sm:$0x1]
        %v732 = vlaneseq
        %v733 = vshrl.u32 %v732, 7
        %v734 = vsub.s32 0, %v733
        %v735 = vrot.slane %v730, %v734
        %v769 = vunpack.c.l.b16 %v698
        %v770 = vunpack.c.l.b16 %v699
        %v771 = vunpack.c.l.b16 %v700
        %v772 = vunpack.c.l.b16 %v701
        %v773 = vunpack.c.l.b16 %v702
        %v774 = vunpack.c.l.b16 %v703
        %v775 = vunpack.c.l.b16 %v704
        %v776 = vunpack.c.l.b16 %v705
        %v777 = vunpack.c.l.b16 %v706
        %v778 = vunpack.c.l.b16 %v707
        %v779 = vunpack.c.l.b16 %v708
        %v780 = vunpack.c.l.b16 %v709
        %v781 = vunpack.c.l.b16 %v710
        %v782 = vunpack.c.l.b16 %v711
        %v783 = vunpack.c.l.b16 %v712
        %v784 = vunpack.c.l.b16 %v713
        %v785 = vunpack.c.l.b16 %v714
        %v786 = vunpack.c.l.b16 %v715
        %v787 = vunpack.c.l.b16 %v716
        %v788 = vunpack.c.l.b16 %v717
        %v789 = vunpack.c.l.b16 %v718
        %v790 = vunpack.c.l.b16 %v719
        %v791 = vunpack.c.l.b16 %v720
        %v792 = vunpack.c.l.b16 %v721
        %v793 = vunpack.c.l.b16 %v722
        %v794 = vunpack.c.l.b16 %v723
        %v795 = vunpack.c.l.b16 %v724
        %v796 = vunpack.c.l.b16 %v725
        %v797 = vunpack.c.l.b16 %v726
        %v798 = vunpack.c.l.b16 %v727
        %v799 = vunpack.c.l.b16 %v728
        %v800 = vunpack.c.l.b16 %v729
        %v801 = vpack.c.b16 %v770, %v769
        %v802 = vpack.c.b16 %v772, %v771
        %v803 = vpack.c.b16 %v774, %v773
        %v804 = vpack.c.b16 %v776, %v775
        %v805 = vpack.c.b16 %v778, %v777
        %v806 = vpack.c.b16 %v780, %v779
        %v807 = vpack.c.b16 %v782, %v781
        %v808 = vpack.c.b16 %v784, %v783
        %v809 = vpack.c.b16 %v786, %v785
        %v810 = vpack.c.b16 %v788, %v787
        %v811 = vpack.c.b16 %v790, %v789
        %v812 = vpack.c.b16 %v792, %v791
        %v813 = vpack.c.b16 %v794, %v793
        %v814 = vpack.c.b16 %v796, %v795
        %v815 = vpack.c.b16 %v798, %v797
        %v816 = vpack.c.b16 %v800, %v799
        %833 = vmatprep.subr.bf16.mxu0 0
        %834 = vmatpush1.bf16.msra.mxu0 %v808
        %835 = vmatprep.subr.bf16.mxu0 0
        %836 = vmatpush1.bf16.msra.mxu0 %v807
        %837 = vmatprep.subr.bf16.mxu0 0
        %838 = vmatpush1.bf16.msra.mxu0 %v806
        %839 = vmatprep.subr.bf16.mxu0 0
        %840 = vmatpush1.bf16.msra.mxu0 %v805
        %841 = vmatprep.subr.bf16.mxu0 0
        %842 = vmatpush1.bf16.msra.mxu0 %v804
        %843 = vmatprep.subr.bf16.mxu0 0
        %844 = vmatpush1.bf16.msra.mxu0 %v803
        %845 = vmatprep.subr.bf16.mxu0 0
        %846 = vmatpush1.bf16.msra.mxu0 %v802
        %847 = vmatprep.subr.bf16.mxu0 0
        %848 = vmatpush1.bf16.msra.mxu0 %v801
        %849 = vmatprep.subr.bf16.mxu0 0
        %850 = vmatpush2.bf16.msra.mxu0 %v816
        %851 = vmatprep.subr.bf16.mxu0 0
        %852 = vmatpush2.bf16.msra.mxu0 %v815
        %853 = vmatprep.subr.bf16.mxu0 0
        %854 = vmatpush2.bf16.msra.mxu0 %v814
        %855 = vmatprep.subr.bf16.mxu0 0
        %856 = vmatpush2.bf16.msra.mxu0 %v813
        %857 = vmatprep.subr.bf16.mxu0 0
        %858 = vmatpush2.bf16.msra.mxu0 %v812
        %859 = vmatprep.subr.bf16.mxu0 0
        %860 = vmatpush2.bf16.msra.mxu0 %v811
        %861 = vmatprep.subr.bf16.mxu0 0
        %862 = vmatpush2.bf16.msra.mxu0 %v810
        %863 = vmatprep.subr.bf16.mxu0 0
        %864 = vmatpush2.bf16.msra.mxu0 %v809
        %865 = vmatprep.mubr.bf16.mxu0 %v697
        %866 = vmatmul.mubr.bf16.gmra.mxu0 %v696
        %v867 = vpop.f32.mrf.mxu0
        %v868 = vadd.f32 %v735, %v867
        %v869 = vpop.f32.mrf.mxu0
        %v870 = vpop.f32.mrf.mxu0
        %v871 = vpop.f32.mrf.mxu0
        %872 = vdwg.mxu0
        %v873 = vtanh.pop %v868
        %874 = vst [vmem:[%s348] sm:$0xff] %v873
        %s875 = sand.u32 %s191, 1
        %s876 = scalar_lea.sflag [#allocation4], %s875
        %s877 = sand.u32 %s191, 1
        %s878 = smul.addr %s877, 8
        %s879 = scalar_lea.vmem [#allocation10], %s878
        // Predicated region
        $region65: #{tpu_custom_call.1} parent=47 // pred_check
          %p880 = pneg %p201
        $region66: #{tpu_custom_call.1} parent=47 // pred_check_branch
          %882 = sbr.rel (%p880) target = $region68
        $region67: #{tpu_custom_call.1} parent=47 // pred_region
          %s884 = ssub.s32 128, 128
          %885 = vsyncadd %s876, %s884
          %s886 = smul.addr %s26, 128
          %s887 = scalar_lea.hbm %s7, %s886
          %s889 = sshll.u32 %s879, 4
          %s890 = int_to_ptr.vmem [resolvable:$true] %s889
          %892 = dma.vmem_to_hbm [thread:$0]  %s890, 128, %s887, %s876
        $region68: #{tpu_custom_call.1} parent=47 // pred_fallthru
          _
      $region48: #{tpu_custom_call.1} parent=5 // pred_fallthru
        _
      %p893 = scmp.le.s32.totalorder 2, %s21
      // Predicated region
      $region69: #{tpu_custom_call.1} parent=5 // pred_check
        %p894 = pneg %p893
      $region70: #{tpu_custom_call.1} parent=5 // pred_check_branch
        %896 = sbr.rel (%p894) target = $region72
      $region71: #{tpu_custom_call.1} parent=5 // pred_region
        %s897 = ssub.s32 %s21, 2
        // Predicated region
        $region73: #{tpu_custom_call.1} parent=71 // pred_check
          %p898 = pneg %p207
        $region74: #{tpu_custom_call.1} parent=71 // pred_check_branch
          %900 = sbr.rel (%p898) target = $region76
        $region75: #{tpu_custom_call.1} parent=71 // pred_region
          %s901 = sand.u32 %s192, 1
          %s902 = scalar_lea.sflag [#allocation4], %s901
          %s903 = sand.u32 %s192, 1
          %s904 = smul.addr %s903, 8
          %s905 = scalar_lea.vmem [#allocation10], %s904
          %906 = dma.done %s902, 128
        $region76: #{tpu_custom_call.1} parent=71 // pred_fallthru
          _
      $region72: #{tpu_custom_call.1} parent=5 // pred_fallthru
        _
    $region6: #{tpu_custom_call.1} parent=1 // loop_footer
      %s25 = sadd.s32 1, %s21
    $region7: #{tpu_custom_call.1} parent=1 // loop_footer_branch
      %20 = sbr.rel target = $region3
    $region8: #{tpu_custom_call.1} parent=1 // loop_exit
      _
    %907 = vsyncpa [#allocation3], 1
    %s908 = scalar_lea.sflag [#allocation3], 1
    %909 = vsyncpa %s908, 1
    %910 = vsyncpa [#allocation6], 1
    %911 = vsyncpa [#allocation9], 1
    %s912 = scalar_lea.sflag [#allocation9], 1
    %913 = vsyncpa %s912, 1
    %914 = vsyncpa [#allocation4], 1
    %s915 = scalar_lea.sflag [#allocation4], 1
    %916 = vsyncpa %s915, 1

</llo_original>
